<compile_context>
chip_gen: v5e
topology: v5e:2x2
jax: 0.10.0
libtpu: 0.0.40
codegen_flags: <defaults>
</compile_context>

<pallas_src>
import math

import jax
import jax.numpy as jnp
from jax.experimental import pallas as pl
from jax.experimental.pallas import tpu as pltpu


def _fusion_kernel(w_ref, f1_ref, f2_ref, o_ref):
    # w_ref lives in SMEM and holds the already-normalized weights
    # [alpha_w, beta_w] as f32 scalars.
    aw = w_ref[0]
    bw = w_ref[1]
    # Elementwise hot path on the VPU; accumulate in f32 (weights are f32),
    # explicit cast back to the output dtype.
    o_ref[...] = (aw * f1_ref[...] + bw * f2_ref[...]).astype(o_ref.dtype)


def _as_2d(x):
    """Flatten an arbitrary-rank tensor to a 2-D row-major view, preferring a
    lane-dense last dim of 128 when the total element count allows it."""
    total = math.prod(x.shape)
    if total % 128 == 0:
        return x.reshape(total // 128, 128)
    if x.ndim == 2:
        return x
    if x.ndim == 1:
        return x.reshape(1, total)
    return x.reshape(math.prod(x.shape[:-1]), x.shape[-1])


def _choose_tm(n, d, itemsize, target_block_bytes):
    # Sublane packing: bf16/fp8 pack 16+ rows per vreg, f32 packs 8. Keep row
    # tiles a multiple of the sublane pack so blocks stay (8,128)-aligned.
    sub = 16 if itemsize <= 2 else 8
    rows = (target_block_bytes // max(d * itemsize, 1)) // sub * sub
    tm = max(sub, rows)
    if tm >= n:
        # Single block equal to the full array dims (always a legal block shape).
        tm = n
    return tm


def feature_fusion(feature_1, feature_2, alpha, beta, *, use_softmax=True,
                   target_block_bytes=2 * 1024 * 1024):
    assert feature_1.shape == feature_2.shape
    assert feature_1.dtype == feature_2.dtype
    orig_shape = feature_1.shape
    dtype = feature_1.dtype
    itemsize = jnp.dtype(dtype).itemsize

    # --- Gate computation hoisted out of the kernel (runs once, not per tile).
    if use_softmax:
        weights = jax.nn.softmax(
            jnp.stack([alpha, beta]).astype(jnp.float32)).astype(jnp.float32)
    else:
        aw = jax.nn.sigmoid(jnp.asarray(alpha, dtype=jnp.float32))
        weights = jnp.stack([aw, 1.0 - aw]).astype(jnp.float32)

    # --- Lane-dense 2-D layout (unmasked vst on the store path when possible).
    f1 = _as_2d(feature_1)
    f2 = _as_2d(feature_2)
    Nk, Dk = f1.shape

    # --- Large row tiles: ~target_block_bytes per pipeline buffer.
    # 3 streams x 2 pipeline buffers x 2 MiB ~= 12 MiB of VMEM -> safe on
    # v5e/v6e (128 MiB physical) and v7x (64 MiB physical).
    tm = _choose_tm(Nk, Dk, itemsize, target_block_bytes)
    grid = (pl.cdiv(Nk, tm),)

    total = Nk * Dk
    cost = pl.CostEstimate(
        flops=3 * total,                       # 2 mul + 1 add per element
        transcendentals=0,
        bytes_accessed=3 * total * itemsize,   # 2 loads + 1 store
    )

    out = pl.pallas_call(
        _fusion_kernel,
        out_shape=jax.ShapeDtypeStruct((Nk, Dk), dtype),
        grid_spec=pltpu.PrefetchScalarGridSpec(
            num_scalar_prefetch=0,
            grid=grid,
            in_specs=[
                pl.BlockSpec(memory_space=pltpu.SMEM),        # [alpha_w, beta_w]
                pl.BlockSpec((tm, Dk), lambda i: (i, 0)),     # feature_1 tile
                pl.BlockSpec((tm, Dk), lambda i: (i, 0)),     # feature_2 tile
            ],
            out_specs=pl.BlockSpec((tm, Dk), lambda i: (i, 0)),
        ),
        compiler_params=pltpu.CompilerParams(
            dimension_semantics=("parallel",),
            vmem_limit_bytes=32 * 1024 * 1024,
        ),
        cost_estimate=cost,
    )(weights, f1, f2)

    return out.reshape(orig_shape)


def feature_fusion_ref(feature_1, feature_2, alpha, beta, use_softmax=True):
    if use_softmax:
        w = jax.nn.softmax(jnp.stack([alpha, beta]).astype(jnp.float32))
        aw, bw = w[0], w[1]
    else:
        aw = jax.nn.sigmoid(jnp.asarray(alpha, dtype=jnp.float32))
        bw = 1.0 - aw
    return aw * feature_1 + bw * feature_2


if __name__ == "__main__":
    key = jax.random.PRNGKey(0)
    k1, k2, k3, k4, k5, k6 = jax.random.split(key, 6)

    # Deterministic parameter init: matches torch.nn.Parameter(torch.tensor(1.)).
    alpha = jnp.float32(1.0)
    beta = jnp.float32(1.0)

    # Case 1: lane-aligned f32 features, softmax gating (single full block).
    N, D = 64, 128
    f1 = jax.random.normal(k1, (N, D), dtype=jnp.float32)
    f2 = jax.random.normal(k2, (N, D), dtype=jnp.float32)
    out = jax.block_until_ready(feature_fusion(f1, f2, alpha, beta, use_softmax=True))
    ref = feature_fusion_ref(f1, f2, alpha, beta, use_softmax=True)
    assert out.shape == (N, D) and out.dtype == f1.dtype
    assert jnp.allclose(out, ref, atol=1e-5, rtol=1e-5)

    # Case 2: narrow hidden dim (D=32) in bf16, sigmoid branch — exercises the
    # lane-dense reshape path and the explicit bf16 cast on store.
    N2, D2 = 24, 32
    g1 = jax.random.normal(k3, (N2, D2), dtype=jnp.bfloat16)
    g2 = jax.random.normal(k4, (N2, D2), dtype=jnp.bfloat16)
    out2 = jax.block_until_ready(feature_fusion(g1, g2, alpha, beta, use_softmax=False))
    ref2 = feature_fusion_ref(g1, g2, alpha, beta, use_softmax=False)
    assert out2.shape == (N2, D2) and out2.dtype == g1.dtype
    assert jnp.allclose(out2.astype(jnp.float32), ref2.astype(jnp.float32),
                        atol=2e-2, rtol=2e-2)

    # Case 3: multi-block grid with a partial trailing block (cdiv path);
    # small target_block_bytes just to exercise the tiling at small shapes.
    N3, D3 = 600, 128
    h1 = jax.random.normal(k5, (N3, D3), dtype=jnp.float32)
    h2 = jax.random.normal(k6, (N3, D3), dtype=jnp.float32)
    out3 = jax.block_until_ready(
        feature_fusion(h1, h2, alpha, beta, use_softmax=True,
                       target_block_bytes=64 * 1024))
    ref3 = feature_fusion_ref(h1, h2, alpha, beta, use_softmax=True)
    assert out3.shape == (N3, D3)
    assert jnp.allclose(out3, ref3, atol=1e-5, rtol=1e-5)

    print("KERNEL_OK")
</pallas_src>

<mosaic_0001>
module attributes {stable_mosaic.version = 11 : i64} {
  func.func @_fusion_kernel(%arg0: i32, %arg1: memref<2xf32, #tpu.memory_space<smem>>, %arg2: memref<64x128xf32, #tpu.memory_space<vmem>>, %arg3: memref<64x128xf32, #tpu.memory_space<vmem>>, %arg4: memref<64x128xf32, #tpu.memory_space<vmem>>) attributes {dimension_semantics = [#tpu.dimension_semantics<parallel>], iteration_bounds = array<i64: 1>, scalar_prefetch = 0 : i64, scratch_operands = 0 : i64, tpu.core_type = #tpu.core_type<tc>, window_params = [{transform_indices = @transform_0, window_bounds = array<i64: 2>}, {transform_indices = @transform_1, window_bounds = array<i64: 64, 128>}, {transform_indices = @transform_2, window_bounds = array<i64: 64, 128>}, {transform_indices = @transform_3, window_bounds = array<i64: 64, 128>}]} {
    %c0 = arith.constant 0 : index
    %0 = memref.load %arg1[%c0] : memref<2xf32, #tpu.memory_space<smem>>
    %c1 = arith.constant 1 : index
    %1 = memref.load %arg1[%c1] : memref<2xf32, #tpu.memory_space<smem>>
    %c0_0 = arith.constant 0 : index
    %c0_1 = arith.constant 0 : index
    %2 = vector.load %arg2[%c0_0, %c0_1] : memref<64x128xf32, #tpu.memory_space<vmem>>, vector<64x128xf32>
    %3 = vector.broadcast %0 : f32 to vector<64x128xf32>
    %4 = arith.mulf %3, %2 : vector<64x128xf32>
    %c0_2 = arith.constant 0 : index
    %c0_3 = arith.constant 0 : index
    %5 = vector.load %arg3[%c0_2, %c0_3] : memref<64x128xf32, #tpu.memory_space<vmem>>, vector<64x128xf32>
    %6 = vector.broadcast %1 : f32 to vector<64x128xf32>
    %7 = arith.mulf %6, %5 : vector<64x128xf32>
    %8 = arith.addf %4, %7 : vector<64x128xf32>
    %c0_4 = arith.constant 0 : index
    %c0_5 = arith.constant 0 : index
    %9 = vector.load %arg4[%c0_4, %c0_5] : memref<64x128xf32, #tpu.memory_space<vmem>>, vector<64x128xf32>
    tpu.vector_store %arg4[%c0_4, %c0_5], %8 {strides = array<i32>} : memref<64x128xf32, #tpu.memory_space<vmem>>, vector<64x128xf32>,
    return
  }
  func.func @transform_0(%arg0: i32) -> i32 {
    %c0_i32 = arith.constant 0 : i32
    %c0_i32_0 = arith.constant 0 : i32
    return %c0_i32 : i32
  }
  func.func @transform_1(%arg0: i32) -> (i32, i32) {
    %c0_i32 = arith.constant 0 : i32
    %c0_i32_0 = arith.constant 0 : i32
    return %arg0, %c0_i32 : i32, i32
  }
  func.func @transform_2(%arg0: i32) -> (i32, i32) {
    %c0_i32 = arith.constant 0 : i32
    %c0_i32_0 = arith.constant 0 : i32
    return %arg0, %c0_i32 : i32, i32
  }
  func.func @transform_3(%arg0: i32) -> (i32, i32) {
    %c0_i32 = arith.constant 0 : i32
    %c0_i32_0 = arith.constant 0 : i32
    return %arg0, %c0_i32 : i32, i32
  }
}

</mosaic_0001>

<llo_original>
// kernel: tpu_custom_call.1
$region0: #{tpu_custom_call.1}
  #allocation0 [shape = 'u32[]', space=smem, size = 0x4, offset = 0x4, fixed_abs, tag = 'smem constant byte address 0x4 - core index']
  #allocation1 [shape = 'u32[72,128]{1,0:T(1,128)}', space=vmem, size = 0x9000, scoped, tag = 'internal scratch']
  %s0 = inlined_call_operand.hbm [shape: f32[2], index: 0, kind: input, shape index: {}]
  %s1 = inlined_call_operand.hbm [shape: f32[64,128], index: 1, kind: input, shape index: {}]
  %s2 = inlined_call_operand.hbm [shape: f32[64,128], index: 2, kind: input, shape index: {}]
  %s3 = inlined_call_operand.hbm [shape: f32[64,128], index: 3, kind: output, shape index: {}]
  %s4 = sld [smem:[#allocation0]]
  $region34: #{tpu_custom_call.1} parent=0
    _
  %s6 = ssub.s32 1, %s4
  %s7 = scalar_select 0, %s6, %s4
  $region1: #{tpu_custom_call.1} parent=0
    #allocation2 [shape = 'u8[512]{0}', space=smem, size = 0x200, scoped, tag = 'input window, operand 0, single buffered']
    #allocation3 [shape = 's32[1]{0}', space=sflag, size = 0x4, scoped, tag = 'scoped memory for tpu_custom_call.1']
    #allocation4 [shape = 's32[1]{0}', space=sflag, size = 0x4, scoped, tag = 'scoped memory for tpu_custom_call.1']
    #allocation5 [shape = 's32[1]{0}', space=sflag, size = 0x4, scoped, tag = 'scoped memory for tpu_custom_call.1']
    #allocation6 [shape = 'u8[32768]{0}', space=vmem, size = 0x8000, scoped, tag = 'input window, operand 1, single buffered']
    #allocation7 [shape = 'u8[32768]{0}', space=vmem, size = 0x8000, scoped, tag = 'input window, operand 2, single buffered']
    #allocation8 [shape = 's32[1]{0}', space=sflag, size = 0x4, scoped, tag = 'scoped memory for tpu_custom_call.1']
    #allocation9 [shape = 'u8[32768]{0}', space=vmem, size = 0x8000, scoped, tag = 'output window, operand 0, single buffered']
    %8 = vsyncpa [#allocation5], 0
    %9 = vsyncpa [#allocation3], 0
    %10 = vsyncpa [#allocation8], 0
    %11 = vsyncpa [#allocation4], 0
    // Predicated region
    $region2: #{tpu_custom_call.1} parent=1 // pred_check
      _
    $region3: #{tpu_custom_call.1} parent=1 // pred_check_branch
      %13 = sbr.rel (0) target = $region5
    $region4: #{tpu_custom_call.1} parent=1 // pred_region
      %15 = vsyncadd [#allocation5], 0
      %s17 = sshll.u32 %s0, 4
      %s18 = int_to_ptr.hbm [resolvable:$true] %s17
      %20 = dma.hbm_to_smem %s18, 16, [#allocation2], [#allocation5]
    $region5: #{tpu_custom_call.1} parent=1 // pred_fallthru
      _
    // Predicated region
    $region6: #{tpu_custom_call.1} parent=1 // pred_check
      _
    $region7: #{tpu_custom_call.1} parent=1 // pred_check_branch
      %22 = sbr.rel (0) target = $region9
    $region8: #{tpu_custom_call.1} parent=1 // pred_region
      %24 = vsyncadd [#allocation3], 0
      %s25 = sshll.u32 %s1, 4
      %s26 = int_to_ptr.hbm [resolvable:$true] %s25
      %s27 = sshll.u32 [#allocation6], 4
      %s28 = int_to_ptr.vmem [resolvable:$true] %s27
      %33 = dma.hbm_to_vmem [thread:$0]  %s26, 1024, %s28, [#allocation3], 128, 128, 8
    $region9: #{tpu_custom_call.1} parent=1 // pred_fallthru
      _
    // Predicated region
    $region10: #{tpu_custom_call.1} parent=1 // pred_check
      _
    $region11: #{tpu_custom_call.1} parent=1 // pred_check_branch
      %35 = sbr.rel (0) target = $region13
    $region12: #{tpu_custom_call.1} parent=1 // pred_region
      %37 = vsyncadd [#allocation8], 0
      %s38 = sshll.u32 %s2, 4
      %s39 = int_to_ptr.hbm [resolvable:$true] %s38
      %s40 = sshll.u32 [#allocation7], 4
      %s41 = int_to_ptr.vmem [resolvable:$true] %s40
      %46 = dma.hbm_to_vmem [thread:$0]  %s39, 1024, %s41, [#allocation8], 128, 128, 8
    $region13: #{tpu_custom_call.1} parent=1 // pred_fallthru
      _
    // Predicated region
    $region14: #{tpu_custom_call.1} parent=1 // pred_check
      _
    $region15: #{tpu_custom_call.1} parent=1 // pred_check_branch
      %48 = sbr.rel (0) target = $region17
    $region16: #{tpu_custom_call.1} parent=1 // pred_region
      %50 = dma.done [#allocation5], 16
    $region17: #{tpu_custom_call.1} parent=1 // pred_fallthru
      _
    // Predicated region
    $region18: #{tpu_custom_call.1} parent=1 // pred_check
      _
    $region19: #{tpu_custom_call.1} parent=1 // pred_check_branch
      %52 = sbr.rel (0) target = $region21
    $region20: #{tpu_custom_call.1} parent=1 // pred_region
      %54 = dma.done [#allocation3], 1024
    $region21: #{tpu_custom_call.1} parent=1 // pred_fallthru
      _
    // Predicated region
    $region22: #{tpu_custom_call.1} parent=1 // pred_check
      _
    $region23: #{tpu_custom_call.1} parent=1 // pred_check_branch
      %56 = sbr.rel (0) target = $region25
    $region24: #{tpu_custom_call.1} parent=1 // pred_region
      %58 = dma.done [#allocation8], 1024
    $region25: #{tpu_custom_call.1} parent=1 // pred_fallthru
      _
    %59 = sfence
    %s60 = sld [smem:[#allocation2]]
    %s61 = sld [smem:[#allocation2 + $0x1]]
    %v62 = vld [vmem:[#allocation6] sm:$0xff]
    %v63 = vld [vmem:[#allocation6 + $0x8] sm:$0xff]
    %v64 = vld [vmem:[#allocation6 + $0x10] sm:$0xff]
    %v65 = vld [vmem:[#allocation6 + $0x18] sm:$0xff]
    %v66 = vld [vmem:[#allocation6 + $0x20] sm:$0xff]
    %v67 = vld [vmem:[#allocation6 + $0x28] sm:$0xff]
    %v68 = vld [vmem:[#allocation6 + $0x30] sm:$0xff]
    %v69 = vld [vmem:[#allocation6 + $0x38] sm:$0xff]
    %v70 = vstv %s60
    %v71 = vmul.f32 %v70, %v62
    %v72 = vmul.f32 %v70, %v63
    %v73 = vmul.f32 %v70, %v64
    %v74 = vmul.f32 %v70, %v65
    %v75 = vmul.f32 %v70, %v66
    %v76 = vmul.f32 %v70, %v67
    %v77 = vmul.f32 %v70, %v68
    %v78 = vmul.f32 %v70, %v69
    %v79 = vld [vmem:[#allocation7] sm:$0xff]
    %v80 = vld [vmem:[#allocation7 + $0x8] sm:$0xff]
    %v81 = vld [vmem:[#allocation7 + $0x10] sm:$0xff]
    %v82 = vld [vmem:[#allocation7 + $0x18] sm:$0xff]
    %v83 = vld [vmem:[#allocation7 + $0x20] sm:$0xff]
    %v84 = vld [vmem:[#allocation7 + $0x28] sm:$0xff]
    %v85 = vld [vmem:[#allocation7 + $0x30] sm:$0xff]
    %v86 = vld [vmem:[#allocation7 + $0x38] sm:$0xff]
    %v87 = vstv %s61
    %v88 = vmul.f32 %v87, %v79
    %v89 = vmul.f32 %v87, %v80
    %v90 = vmul.f32 %v87, %v81
    %v91 = vmul.f32 %v87, %v82
    %v92 = vmul.f32 %v87, %v83
    %v93 = vmul.f32 %v87, %v84
    %v94 = vmul.f32 %v87, %v85
    %v95 = vmul.f32 %v87, %v86
    %v96 = vadd.f32 %v71, %v88
    %v97 = vadd.f32 %v72, %v89
    %v98 = vadd.f32 %v73, %v90
    %v99 = vadd.f32 %v74, %v91
    %v100 = vadd.f32 %v75, %v92
    %v101 = vadd.f32 %v76, %v93
    %v102 = vadd.f32 %v77, %v94
    %v103 = vadd.f32 %v78, %v95
    %104 = vst [vmem:[#allocation9] sm:$0xff] %v96
    %105 = vst [vmem:[#allocation9 + $0x8] sm:$0xff] %v97
    %106 = vst [vmem:[#allocation9 + $0x10] sm:$0xff] %v98
    %107 = vst [vmem:[#allocation9 + $0x18] sm:$0xff] %v99
    %108 = vst [vmem:[#allocation9 + $0x20] sm:$0xff] %v100
    %109 = vst [vmem:[#allocation9 + $0x28] sm:$0xff] %v101
    %110 = vst [vmem:[#allocation9 + $0x30] sm:$0xff] %v102
    %111 = vst [vmem:[#allocation9 + $0x38] sm:$0xff] %v103
    // Predicated region
    $region26: #{tpu_custom_call.1} parent=1 // pred_check
      _
    $region27: #{tpu_custom_call.1} parent=1 // pred_check_branch
      %113 = sbr.rel (0) target = $region29
    $region28: #{tpu_custom_call.1} parent=1 // pred_region
      %115 = vsyncadd [#allocation4], 0
      %s116 = sshll.u32 [#allocation9], 4
      %s117 = int_to_ptr.vmem [resolvable:$true] %s116
      %s118 = sshll.u32 %s3, 4
      %s119 = int_to_ptr.hbm [resolvable:$true] %s118
      %124 = dma.vmem_to_hbm [thread:$0]  %s117, 1024, %s119, [#allocation4], 128, 128, 8
    $region29: #{tpu_custom_call.1} parent=1 // pred_fallthru
      _
    // Predicated region
    $region30: #{tpu_custom_call.1} parent=1 // pred_check
      _
    $region31: #{tpu_custom_call.1} parent=1 // pred_check_branch
      %126 = sbr.rel (0) target = $region33
    $region32: #{tpu_custom_call.1} parent=1 // pred_region
      %128 = dma.done [#allocation4], 1024
    $region33: #{tpu_custom_call.1} parent=1 // pred_fallthru
      _
    %129 = vsyncpa [#allocation3], 1
    %130 = vsyncpa [#allocation8], 1
    %131 = vsyncpa [#allocation4], 1
    %132 = vsyncpa [#allocation5], 1

</llo_original>
